<compile_context>
chip_gen: v6e
topology: v6e:2x2x1
jax: 0.10.0
libtpu: 0.0.40
codegen_flags: <defaults>
</compile_context>

<pallas_src>
import functools
import math

import jax
import jax.numpy as jnp
from jax.experimental import pallas as pl
from jax.experimental.pallas import tpu as pltpu

_VMEM_LIMIT = 48 * 1024 * 1024  # explicit scoped-VMEM budget (fits v5e/v6e/v7x)


def _round_up(x, m):
    return (x + m - 1) // m * m


# ----------------------------- Linear (matmul) kernels -----------------------------
def _linear_kernel(x_ref, w_ref, o_ref):
    o_ref[...] = jnp.dot(
        x_ref[...], w_ref[...], preferred_element_type=jnp.float32
    ).astype(o_ref.dtype)


def _linear_bias_kernel(x_ref, w_ref, b_ref, o_ref):
    acc = jnp.dot(x_ref[...], w_ref[...], preferred_element_type=jnp.float32)
    o_ref[...] = (acc + b_ref[...].astype(jnp.float32)).astype(o_ref.dtype)


def pallas_linear(x, w, b=None, *, tile_m=256, tile_n=512, out_dtype=None):
    """x:(M,K) @ w:(K,N) [+ b:(1,N)] -> (M,N), f32 MXU accumulation.

    Rows are tiled so the grid has >=2 steps whenever M > 8 (keeps both v7x
    TensorCores busy and the DMA pipeline deep) with minimal padding; output
    columns are tiled lane-dense so the streamed weight block stays small.
    """
    M, K = x.shape
    Kw, N = w.shape
    assert K == Kw
    if out_dtype is None:
        out_dtype = x.dtype

    # --- row (M) tiling: minimal padding, >=2 grid steps when possible --------
    g_m = max(1, -(-M // tile_m))
    if M > 8:
        g_m = max(g_m, 2)
    if g_m == 1:
        tm, M_pad = M, M
    else:
        tm = _round_up(-(-M // g_m), 8)
        M_pad = tm * g_m
    if M_pad != M:
        x = jnp.pad(x, ((0, M_pad - M), (0, 0)))

    # --- column (N) tiling: lane-dense (multiple of 128) blocks ---------------
    if N <= tile_n:
        tn, N_pad = N, N
    else:
        tn = _round_up(tile_n, 128)
        N_pad = _round_up(N, tn)
        if N_pad != N:
            w = jnp.pad(w, ((0, 0), (0, N_pad - N)))
            if b is not None:
                b = jnp.pad(b, ((0, 0), (0, N_pad - N)))

    grid = (M_pad // tm, N_pad // tn)  # column axis innermost -> x block resident
    x_spec = pl.BlockSpec((tm, K), lambda i, j: (i, 0))
    w_spec = pl.BlockSpec((K, tn), lambda i, j: (0, j))
    o_spec = pl.BlockSpec((tm, tn), lambda i, j: (i, j))

    if b is None:
        kernel, in_specs, args = _linear_kernel, [x_spec, w_spec], (x, w)
    else:
        b_spec = pl.BlockSpec((1, tn), lambda i, j: (0, j))
        kernel, in_specs, args = (_linear_bias_kernel,
                                  [x_spec, w_spec, b_spec], (x, w, b))

    out = pl.pallas_call(
        kernel,
        out_shape=jax.ShapeDtypeStruct((M_pad, N_pad), out_dtype),
        grid_spec=pltpu.PrefetchScalarGridSpec(
            num_scalar_prefetch=0, grid=grid,
            in_specs=in_specs, out_specs=o_spec),
        compiler_params=pltpu.CompilerParams(
            dimension_semantics=("parallel", "parallel"),
            vmem_limit_bytes=_VMEM_LIMIT),
    )(*args)
    return out[:M, :N]


# ------------------------------ Attention kernel -----------------------------------
def _attention_kernel(q_ref, k_ref, v_ref, attn_ref, ctx_ref, *, scale):
    # Refs are 2-D (leading head axis squeezed): q (tq,D), k/v (Nkv,D).
    q = q_ref[...] * scale                      # scale q: tq*D muls, not tq*Nkv
    # scores = (q*scale) @ k^T, contracting head_dim on the MXU, f32 accumulation.
    s = jax.lax.dot_general(q, k_ref[...], (((1,), (1,)), ((), ())),
                            preferred_element_type=jnp.float32)
    m = jnp.max(s, axis=-1, keepdims=True)
    e = jnp.exp(s - m)
    denom = jnp.sum(e, axis=-1, keepdims=True)
    inv = pl.reciprocal(denom, approx=True)     # row-wise EUP reciprocal
    p = e * inv
    attn_ref[...] = p.astype(attn_ref.dtype)
    ctx = jnp.dot(p.astype(v_ref.dtype), v_ref[...],
                  preferred_element_type=jnp.float32)
    ctx_ref[...] = ctx.astype(ctx_ref.dtype)


def multihead_attention(q, k, v, *, scale, attn_dtype=None, ctx_dtype=None,
                        tile_q=256):
    """q:(B,H,Nq,D), k/v:(B,H,Nkv,D) -> attn:(B,H,Nq,Nkv), ctx:(B,H,Nq,D)."""
    B, H, Nq, D = q.shape
    Nkv = k.shape[2]
    if attn_dtype is None:
        attn_dtype = q.dtype
    if ctx_dtype is None:
        ctx_dtype = q.dtype
    qf = q.reshape(B * H, Nq, D)
    kf = k.reshape(B * H, Nkv, D)
    vf = v.reshape(B * H, Nkv, D)

    # Tile query rows so the (tq, Nkv) score/attn block (not (Nq, Nkv)) bounds
    # VMEM on long sequences and the pipeline gets >=2 steps per head.
    if Nq <= tile_q:
        tq, Nq_pad = Nq, Nq
    else:
        tq = _round_up(min(tile_q, Nq), 8)
        Nq_pad = _round_up(Nq, tq)
        if Nq_pad != Nq:
            qf = jnp.pad(qf, ((0, 0), (0, Nq_pad - Nq), (0, 0)))

    grid = (B * H, Nq_pad // tq)  # q-tile axis innermost -> k/v blocks resident
    kernel = functools.partial(_attention_kernel, scale=scale)
    attn, ctx = pl.pallas_call(
        kernel,
        out_shape=(
            jax.ShapeDtypeStruct((B * H, Nq_pad, Nkv), attn_dtype),
            jax.ShapeDtypeStruct((B * H, Nq_pad, D), ctx_dtype),
        ),
        grid_spec=pltpu.PrefetchScalarGridSpec(
            num_scalar_prefetch=0,
            grid=grid,
            in_specs=[
                pl.BlockSpec((pl.Squeezed(), tq, D), lambda b, i: (b, i, 0)),
                pl.BlockSpec((pl.Squeezed(), Nkv, D), lambda b, i: (b, 0, 0)),
                pl.BlockSpec((pl.Squeezed(), Nkv, D), lambda b, i: (b, 0, 0)),
            ],
            out_specs=(
                pl.BlockSpec((pl.Squeezed(), tq, Nkv), lambda b, i: (b, i, 0)),
                pl.BlockSpec((pl.Squeezed(), tq, D), lambda b, i: (b, i, 0)),
            ),
        ),
        compiler_params=pltpu.CompilerParams(
            dimension_semantics=("parallel", "parallel"),
            vmem_limit_bytes=_VMEM_LIMIT),
    )(qf, kf, vf)

    if Nq_pad != Nq:
        attn = attn[:, :Nq]
        ctx = ctx[:, :Nq]
    return attn.reshape(B, H, Nq, Nkv), ctx.reshape(B, H, Nq, D)


# ------------------------------- Module wrapper -------------------------------------
class AttentionPallas:
    """JAX/Pallas equivalent of the PyTorch Attention module (eval mode).

    compute_dtype: dtype fed to the MXU (accumulation is always f32). bf16 is
      the TPU-native fast path (v6e/v7x); pass jnp.float32 for tight parity
      with the f32 PyTorch reference.
    attn_dtype: dtype of the returned attention matrix. Defaults to x.dtype
      (PyTorch semantics); pass jnp.bfloat16 to halve its HBM writeback when
      the caller does not need full precision.
    """

    def __init__(self, dim, num_heads=8, scale_head=True, kv_token_length=None,
                 compute_dtype=jnp.bfloat16, attn_dtype=None, tile_q=256,
                 key=jax.random.PRNGKey(0)):
        self.dim = dim
        self.num_heads = num_heads
        self.scale = dim ** (-0.5) if not scale_head else (dim // num_heads) ** (-0.5)
        self.kv_token_length = kv_token_length
        self.compute_dtype = compute_dtype
        self.attn_dtype = attn_dtype
        self.tile_q = tile_q

        k1, k2, k3 = jax.random.split(key, 3)
        bound = 1.0 / math.sqrt(dim)
        # PyTorch parameter layouts (f32 masters, used by the reference check).
        self.w_qkv = jax.random.uniform(k1, (3 * dim, dim), jnp.float32, -bound, bound)
        self.w_proj = jax.random.uniform(k2, (dim, dim), jnp.float32, -bound, bound)
        self.b_proj = jax.random.uniform(k3, (dim,), jnp.float32, -bound, bound)
        # Kernel-side copies: transposed and cast once at init (no per-call cost).
        self.w_qkv_t = self.w_qkv.T.astype(compute_dtype)
        self.w_proj_t = self.w_proj.T.astype(compute_dtype)
        self.b_proj_row = self.b_proj.reshape(1, dim)  # f32, added post-accumulation

    def __call__(self, x):
        B, N, C = x.shape
        H = self.num_heads
        D = C // H
        kv_tokens = self.kv_token_length if self.kv_token_length is not None else N
        cd = self.compute_dtype
        attn_dtype = self.attn_dtype if self.attn_dtype is not None else x.dtype

        # 1) QKV projection (no bias), bf16 MXU / f32 accumulation.
        qkv = pallas_linear(x.reshape(B * N, C).astype(cd), self.w_qkv_t,
                            out_dtype=cd)                                 # (B*N, 3C)

        # 2) Head split + last-kv_tokens slice (thin XLA glue).
        # TODO(synk): with head_dim < 128 a per-head column block violates the
        # TPU (8,128) lane-tiling rule, so the head split/merge cannot be folded
        # into the BlockSpecs without a head-major layout that narrows the MXU;
        # the transposes stay in XLA for now.
        qkv = qkv.reshape(B, N, 3, H, D).transpose(2, 0, 3, 1, 4)          # (3,B,H,N,D)
        q, k, v = qkv[0], qkv[1], qkv[2]
        k = k[:, :, N - kv_tokens:]
        v = v[:, :, N - kv_tokens:]

        # 3) Fused scores + softmax + PV.  attn_drop is identity (p=0.0 / eval).
        # TODO(synk): training-mode attn_drop / proj_drop (Dropout) not implemented.
        # TODO(synk): v5e + tiny kv_token_length: pack several heads per grid step
        # for lane-dense attn stores (not implemented; Nkv is the full minor dim).
        attn, ctx = multihead_attention(q, k, v, scale=self.scale,
                                        attn_dtype=attn_dtype, ctx_dtype=cd,
                                        tile_q=self.tile_q)

        # 4) Merge heads + output projection (with bias).
        ctx = ctx.transpose(0, 2, 1, 3).reshape(B * N, C)
        out = pallas_linear(ctx, self.w_proj_t, self.b_proj_row, out_dtype=x.dtype)
        return out.reshape(B, N, C), attn


# ------------------------------- Pure-JAX reference ---------------------------------
def attention_reference(x, w_qkv, w_proj, b_proj, *, num_heads, scale,
                        kv_token_length=None):
    HI = jax.lax.Precision.HIGHEST
    B, N, C = x.shape
    H = num_heads
    D = C // H
    kv_tokens = kv_token_length if kv_token_length is not None else N
    qkv = jnp.matmul(x, w_qkv.T, precision=HI)
    qkv = qkv.reshape(B, N, 3, H, D).transpose(2, 0, 3, 1, 4)
    q, k, v = qkv[0], qkv[1], qkv[2]
    k = k[:, :, -kv_tokens:]
    v = v[:, :, -kv_tokens:]
    attn = jnp.matmul(q, jnp.swapaxes(k, -2, -1), precision=HI) * scale
    attn = jax.nn.softmax(attn, axis=-1)
    out = jnp.matmul(attn, v, precision=HI)
    out = jnp.swapaxes(out, 1, 2).reshape(B, N, C)
    out = jnp.matmul(out, w_proj.T, precision=HI) + b_proj
    return out, attn


# ------------------------------------ main ------------------------------------------
if __name__ == "__main__":
    key = jax.random.PRNGKey(0)
    k_x, k_p = jax.random.split(key)

    B, N, C, H = 2, 24, 32, 4
    x = jax.random.normal(k_x, (B, N, C), jnp.float32)

    # Case 1: f32 compute path, full self-attention, q-row tiling exercised (tq=8).
    mod_f32 = AttentionPallas(dim=C, num_heads=H, scale_head=True,
                              kv_token_length=None, compute_dtype=jnp.float32,
                              tile_q=8, key=k_p)
    out, attn = mod_f32(x)
    jax.block_until_ready((out, attn))
    ref_out, ref_attn = attention_reference(
        x, mod_f32.w_qkv, mod_f32.w_proj, mod_f32.b_proj,
        num_heads=H, scale=mod_f32.scale, kv_token_length=None)
    assert out.shape == (B, N, C) and attn.shape == (B, H, N, N)
    assert attn.dtype == x.dtype
    assert jnp.allclose(out, ref_out, atol=5e-3, rtol=5e-3)
    assert jnp.allclose(attn, ref_attn, atol=2e-3, rtol=2e-3)

    # Case 2: f32 compute path, restricted kv tokens (kv_token_length=4).
    mod_kv = AttentionPallas(dim=C, num_heads=H, scale_head=True,
                             kv_token_length=4, compute_dtype=jnp.float32,
                             tile_q=8, key=k_p)
    out2, attn2 = mod_kv(x)
    jax.block_until_ready((out2, attn2))
    ref_out2, ref_attn2 = attention_reference(
        x, mod_kv.w_qkv, mod_kv.w_proj, mod_kv.b_proj,
        num_heads=H, scale=mod_kv.scale, kv_token_length=4)
    assert attn2.shape == (B, H, N, 4)
    assert jnp.allclose(out2, ref_out2, atol=5e-3, rtol=5e-3)
    assert jnp.allclose(attn2, ref_attn2, atol=2e-3, rtol=2e-3)

    # Case 3: default bf16 MXU path (performance configuration), looser tolerance.
    mod_bf16 = AttentionPallas(dim=C, num_heads=H, scale_head=True,
                               kv_token_length=None, key=k_p)  # compute_dtype=bf16
    out3, attn3 = mod_bf16(x)
    jax.block_until_ready((out3, attn3))
    assert out3.dtype == x.dtype and attn3.dtype == x.dtype
    assert jnp.allclose(out3, ref_out, atol=6e-2, rtol=6e-2)
    assert jnp.allclose(attn3, ref_attn, atol=3e-2, rtol=3e-2)

    print("KERNEL_OK")
</pallas_src>

<mosaic_0001>
module attributes {stable_mosaic.version = 11 : i64} {
  func.func @_linear_kernel(%arg0: i32, %arg1: i32, %arg2: memref<24x32xf32, #tpu.memory_space<vmem>>, %arg3: memref<32x96xf32, #tpu.memory_space<vmem>>, %arg4: memref<24x96xf32, #tpu.memory_space<vmem>>) attributes {dimension_semantics = [#tpu.dimension_semantics<parallel>, #tpu.dimension_semantics<parallel>], iteration_bounds = array<i64: 2, 1>, scalar_prefetch = 0 : i64, scratch_operands = 0 : i64, tpu.core_type = #tpu.core_type<tc>, window_params = [{transform_indices = @transform_0, window_bounds = array<i64: 24, 32>}, {transform_indices = @transform_1, window_bounds = array<i64: 32, 96>}, {transform_indices = @transform_2, window_bounds = array<i64: 24, 96>}]} {
    %c0 = arith.constant 0 : index
    %c0_0 = arith.constant 0 : index
    %0 = vector.load %arg2[%c0, %c0_0] : memref<24x32xf32, #tpu.memory_space<vmem>>, vector<24x32xf32>
    %c0_1 = arith.constant 0 : index
    %c0_2 = arith.constant 0 : index
    %1 = vector.load %arg3[%c0_1, %c0_2] : memref<32x96xf32, #tpu.memory_space<vmem>>, vector<32x96xf32>
    %cst = arith.constant dense<0.000000e+00> : vector<24x96xf32>
    %2 = tpu.matmul %0, %1, %cst {dimension_numbers = #tpu.dot_dimension_numbers<[1], [0], [0], [1], [0, 0, 1, 1], [], []>} : vector<24x32xf32>, vector<32x96xf32>, vector<24x96xf32> -> vector<24x96xf32>
    %c0_3 = arith.constant 0 : index
    %c0_4 = arith.constant 0 : index
    %3 = vector.load %arg4[%c0_3, %c0_4] : memref<24x96xf32, #tpu.memory_space<vmem>>, vector<24x96xf32>
    tpu.vector_store %arg4[%c0_3, %c0_4], %2 {strides = array<i32>} : memref<24x96xf32, #tpu.memory_space<vmem>>, vector<24x96xf32>,
    return
  }
  func.func @transform_0(%arg0: i32, %arg1: i32) -> (i32, i32) {
    %c0_i32 = arith.constant 0 : i32
    %c0_i32_0 = arith.constant 0 : i32
    return %arg0, %c0_i32 : i32, i32
  }
  func.func @transform_1(%arg0: i32, %arg1: i32) -> (i32, i32) {
    %c0_i32 = arith.constant 0 : i32
    %c0_i32_0 = arith.constant 0 : i32
    return %c0_i32, %arg1 : i32, i32
  }
  func.func @transform_2(%arg0: i32, %arg1: i32) -> (i32, i32) {
    %c0_i32 = arith.constant 0 : i32
    return %arg0, %arg1 : i32, i32
  }
}

</mosaic_0001>

<llo_original>
// kernel: tpu_custom_call.1
$region0: #{tpu_custom_call.1}
  #allocation0 [shape = 'u32[]', space=smem, size = 0x4, offset = 0x4, fixed_abs, tag = 'smem constant byte address 0x4 - core index']
  #allocation1 [shape = 'u32[144,128]{1,0:T(1,128)}', space=vmem, size = 0x12000, scoped, tag = 'internal scratch']
  %s0 = inlined_call_operand.vmem [shape: f32[48,32], index: 0, kind: input, shape index: {}]
  %s1 = inlined_call_operand.vmem [shape: f32[32,96], index: 1, kind: input, shape index: {}]
  %s2 = inlined_call_operand.hbm [shape: f32[48,96], index: 2, kind: output, shape index: {}]
  %s3 = sld [smem:[#allocation0]]
  $region41: #{tpu_custom_call.1} parent=0
    _
  %s5 = ssub.s32 1, %s3
  %s6 = scalar_select 0, %s5, %s3
  $region1: #{tpu_custom_call.1} parent=0
    #allocation2 [shape = 'u8[24576]{0}', space=vmem, size = 0x6000, scoped, tag = 'output window, operand 0']
    #allocation3 [shape = 's32[2]{0}', space=sflag, size = 0x8, scoped, tag = 'scoped memory for tpu_custom_call.1']
    %7 = vsyncpa [#allocation3], 0
    %s8 = scalar_lea.sflag [#allocation3], 1
    %9 = vsyncpa %s8, 0
    loop: start=0, step=1, limit=4
    $region2: #{tpu_custom_call.1} parent=1 // loop_pre_header
      _
    $region3: #{tpu_custom_call.1} parent=1 // loop_header
      %s11 = sphi 0, %s15
      %p12 = scmp.ge.s32.totalorder %s11, 4
      %s18 = sphi 0, %s30
      %s19 = sphi 0, %s26
      %s20 = sphi 0, %s18
      %s21 = sphi 0, %s19
      %s22 = sphi 0, %s20
      %s23 = sphi 0, %s21
      %s33 = sphi 0, %s35
      %s36 = sphi 0, %s33
      %s37 = sphi 0, %s36
      %s53 = sphi 0, %s37
      %s59 = sphi 0, %s61
      %s62 = sphi 0, %s59
      %s63 = sphi 0, %s62
      %s79 = sphi 0, %s63
      %s87 = sphi 0, %s89
      %s90 = sphi 0, %s87
      %s91 = sphi 0, %s90
      %s107 = sphi 0, %s91
    $region4: #{tpu_custom_call.1} parent=1 // loop_header_branch
      %14 = sbr.rel (%p12) target = $region8
    $region5: #{tpu_custom_call.1} parent=1 // loop_body
      %s16 = ssub.s32 %s11, 1
      %s17 = ssub.s32 %s11, 2
      %s24 = sadd.s32 1, %s19
      %p25 = scmp.ge.s32.totalorder %s24, 1
      %s26 = scalar_select %p25, 0, %s24
      %s27 = sadd.s32 1, %s18
      %s28 = scalar_select %p25, %s27, %s18
      %p29 = scmp.ge.s32.totalorder %s28, 2
      %s30 = scalar_select %p29, 0, %s28
      %s31 = ssub.s32 %s18, %s30
      %p32 = scmp.eq.s32.totalorder %s31, 0
      %s34 = sadd.s32 %s33, 1
      %s35 = scalar_select %p32, %s33, %s34
      %p38 = pneg %p32
      %p39 = scmp.eq.s32.totalorder %s11, 1
      %p40 = por %p38, %p39
      %p41 = scmp.ne.s32.totalorder %s33, %s36
      %p42 = scmp.eq.s32.totalorder %s11, 0
      %p43 = por %p41, %p42
      %p44 = scmp.ne.s32.totalorder %s33, %s36
      %p45 = scmp.eq.s32.totalorder %s16, 1
      %p46 = por %p44, %p45
      %p47 = scmp.ne.s32.totalorder %s36, %s37
      %p48 = scmp.eq.s32.totalorder %s16, 0
      %p49 = por %p47, %p48
      %p50 = scmp.ne.s32.totalorder %s36, %s37
      %p51 = scmp.eq.s32.totalorder %s17, 1
      %p52 = por %p50, %p51
      %p54 = scmp.ne.s32.totalorder %s37, %s53
      %p55 = scmp.eq.s32.totalorder %s17, 0
      %p56 = por %p54, %p55
      %s57 = ssub.s32 %s19, %s26
      %p58 = scmp.eq.s32.totalorder %s57, 0
      %s60 = sadd.s32 %s59, 1
      %s61 = scalar_select %p58, %s59, %s60
      %p64 = pneg %p58
      %p65 = scmp.eq.s32.totalorder %s11, 1
      %p66 = por %p64, %p65
      %p67 = scmp.ne.s32.totalorder %s59, %s62
      %p68 = scmp.eq.s32.totalorder %s11, 0
      %p69 = por %p67, %p68
      %p70 = scmp.ne.s32.totalorder %s59, %s62
      %p71 = scmp.eq.s32.totalorder %s16, 1
      %p72 = por %p70, %p71
      %p73 = scmp.ne.s32.totalorder %s62, %s63
      %p74 = scmp.eq.s32.totalorder %s16, 0
      %p75 = por %p73, %p74
      %p76 = scmp.ne.s32.totalorder %s62, %s63
      %p77 = scmp.eq.s32.totalorder %s17, 1
      %p78 = por %p76, %p77
      %p80 = scmp.ne.s32.totalorder %s63, %s79
      %p81 = scmp.eq.s32.totalorder %s17, 0
      %p82 = por %p80, %p81
      %s83 = ssub.s32 %s18, %s30
      %s84 = ssub.s32 %s19, %s26
      %s85 = sor.u32 %s83, %s84
      %p86 = scmp.eq.s32.totalorder %s85, 0
      %s88 = sadd.s32 %s87, 1
      %s89 = scalar_select %p86, %s87, %s88
      %p92 = pneg %p86
      %p93 = scmp.eq.s32.totalorder %s11, 1
      %p94 = por %p92, %p93
      %p95 = scmp.ne.s32.totalorder %s87, %s90
      %p96 = scmp.eq.s32.totalorder %s11, 0
      %p97 = por %p95, %p96
      %p98 = scmp.ne.s32.totalorder %s87, %s90
      %p99 = scmp.eq.s32.totalorder %s16, 1
      %p100 = por %p98, %p99
      %p101 = scmp.ne.s32.totalorder %s90, %s91
      %p102 = scmp.eq.s32.totalorder %s16, 0
      %p103 = por %p101, %p102
      %p104 = scmp.ne.s32.totalorder %s90, %s91
      %p105 = scmp.eq.s32.totalorder %s17, 1
      %p106 = por %p104, %p105
      %p108 = scmp.ne.s32.totalorder %s91, %s107
      %p109 = scmp.eq.s32.totalorder %s17, 0
      %p110 = por %p108, %p109
      %p111 = scmp.le.s32.totalorder 1, %s11
      %p112 = scmp.lt.s32.totalorder %s11, 3
      %p113 = pnand %p111, %p112
      %p114 = pneg %p113
      // Predicated region
      $region9: #{tpu_custom_call.1} parent=5 // pred_check
        _
      $region10: #{tpu_custom_call.1} parent=5 // pred_check_branch
        %116 = sbr.rel (%p113) target = $region12
      $region11: #{tpu_custom_call.1} parent=5 // pred_region
        %s117 = ssub.s32 %s11, 1
        // Predicated region
        $region13: #{tpu_custom_call.1} parent=11 // pred_check
          %p118 = pneg %p75
        $region14: #{tpu_custom_call.1} parent=11 // pred_check_branch
          %120 = sbr.rel (%p118) target = $region16
        $region15: #{tpu_custom_call.1} parent=11 // pred_region
          %p121 = scmp.lt.s32.totalorder %s21, 0
          %s122 = scalar_select %p121, %s21, 0
          %s123 = smul.addr %s122, 8
          %s124 = scalar_lea.vmem %s1, %s123
        $region16: #{tpu_custom_call.1} parent=11 // pred_fallthru
          _
      $region12: #{tpu_custom_call.1} parent=5 // pred_fallthru
        _
      %p125 = scmp.lt.s32.totalorder %s11, 2
      // Predicated region
      $region17: #{tpu_custom_call.1} parent=5 // pred_check
        %p126 = pneg %p125
      $region18: #{tpu_custom_call.1} parent=5 // pred_check_branch
        %128 = sbr.rel (%p126) target = $region20
      $region19: #{tpu_custom_call.1} parent=5 // pred_region
        // Predicated region
        $region21: #{tpu_custom_call.1} parent=19 // pred_check
          %p129 = pneg %p43
        $region22: #{tpu_custom_call.1} parent=19 // pred_check_branch
          %131 = sbr.rel (%p129) target = $region24
        $region23: #{tpu_custom_call.1} parent=19 // pred_region
          %s132 = smul.u32 3, %s18
          %p133 = scmp.lt.s32.totalorder %s132, 5
          %s134 = scalar_select %p133, %s132, 5
          %s135 = smul.addr %s134, 8
          %s136 = scalar_lea.vmem %s0, %s135
          %s137 = smul.u32 3, %s18
        $region24: #{tpu_custom_call.1} parent=19 // pred_fallthru
          _
      $region20: #{tpu_custom_call.1} parent=5 // pred_fallthru
        _
      %p138 = scmp.le.s32.totalorder 1, %s11
      %p139 = scmp.lt.s32.totalorder %s11, 3
      %p140 = pnand %p138, %p139
      %p141 = pneg %p140
      // Predicated region
      $region25: #{tpu_custom_call.1} parent=5 // pred_check
        _
      $region26: #{tpu_custom_call.1} parent=5 // pred_check_branch
        %143 = sbr.rel (%p140) target = $region28
      $region27: #{tpu_custom_call.1} parent=5 // pred_region
        %s144 = ssub.s32 %s11, 1
        %s145 = smul.u32 3, %s20
        %p146 = scmp.lt.s32.totalorder %s145, 5
        %s147 = scalar_select %p146, %s145, 5
        %s148 = smul.addr %s147, 8
        %s149 = scalar_lea.vmem %s0, %s148
        %p150 = pneg %p49
        %p151 = pneg %p46
        %p152 = scmp.lt.s32.totalorder %s21, 0
        %s153 = scalar_select %p152, %s21, 0
        %s154 = smul.addr %s153, 8
        %s155 = scalar_lea.vmem %s1, %s154
        %p156 = pneg %p75
        %p157 = pneg %p72
        %p158 = pneg %p103
        %p159 = pneg %p100
        %s160 = sand.u32 %s90, 1
        %s161 = scalar_lea.sflag [#allocation3], %s160
        %s162 = sand.u32 %s90, 1
        %s163 = smul.addr %s162, 24
        %s164 = scalar_lea.vmem [#allocation2], %s163
        %s165 = smul.u32 3, %s20
        %p166 = scmp.lt.s32.totalorder %s165, 5
        %s167 = scalar_select %p166, %s165, 5
        %s168 = smul.addr %s167, 8
        %s169 = scalar_lea.vmem %s0, %s168
        %s170 = smul.u32 3, %s20
        %p171 = scmp.lt.s32.totalorder %s21, 0
        %s172 = scalar_select %p171, %s21, 0
        %s173 = smul.addr %s172, 8
        %s174 = scalar_lea.vmem %s1, %s173
        %s175 = smul.u32 3, %s20
        %v176 = vld [vmem:[%s169] sm:$0xff]
        %v177 = vld [vmem:[%s169 + $0x8] sm:$0xff]
        %v178 = vld [vmem:[%s169 + $0x10] sm:$0xff]
        %v179 = vld [vmem:[%s174] sm:$0xff]
        %v180 = vld [vmem:[%s174 + $0x8] sm:$0xff]
        %v181 = vld [vmem:[%s174 + $0x10] sm:$0xff]
        %v182 = vld [vmem:[%s174 + $0x18] sm:$0xff]
        %vm183 = vcmask 261120
        %v185 = vsel %vm183, %v176, 0
        %v188 = vsel %vm183, %v177, 0
        %v191 = vsel %vm183, %v178, 0
        %193 = vmatprep.subr.mxu0 0.0
        %194 = vmatpush1.msra.mxu0 0.0
        %195 = vmatprep.subr.mxu0 0.0
        %196 = vmatpush1.msra.mxu0 0.0
        %197 = vmatprep.subr.mxu0 0.0
        %198 = vmatpush1.msra.mxu0 0.0
        %199 = vmatprep.subr.mxu0 0.0
        %200 = vmatpush1.msra.mxu0 0.0
        %201 = vmatprep.subr.mxu0 0.0
        %202 = vmatpush1.msra.mxu0 0.0
        %203 = vmatprep.subr.mxu0 0.0
        %204 = vmatpush1.msra.mxu0 0.0
        %205 = vmatprep.subr.mxu0 0.0
        %206 = vmatpush1.msra.mxu0 0.0
        %207 = vmatprep.subr.mxu0 0.0
        %208 = vmatpush1.msra.mxu0 0.0
        %209 = vmatprep.subr.mxu0 0.0
        %210 = vmatpush1.msra.mxu0 0.0
        %211 = vmatprep.subr.mxu0 0.0
        %212 = vmatpush1.msra.mxu0 0.0
        %213 = vmatprep.subr.mxu0 0.0
        %214 = vmatpush1.msra.mxu0 0.0
        %215 = vmatprep.subr.mxu0 0.0
        %216 = vmatpush1.msra.mxu0 0.0
        %217 = vmatprep.subr.mxu0 0.0
        %218 = vmatpush1.msra.mxu0 %v182
        %219 = vmatprep.subr.mxu0 0.0
        %220 = vmatpush1.msra.mxu0 %v181
        %221 = vmatprep.subr.mxu0 0.0
        %222 = vmatpush1.msra.mxu0 %v180
        %223 = vmatprep.subr.mxu0 0.0
        %224 = vmatpush1.msra.mxu0 %v179
        %225 = vmatprep.subr.mxu0 0.0
        %226 = vmatpush2.msra.mxu0 0.0
        %227 = vmatprep.subr.mxu0 0.0
        %228 = vmatpush2.msra.mxu0 0.0
        %229 = vmatprep.subr.mxu0 0.0
        %230 = vmatpush2.msra.mxu0 0.0
        %231 = vmatprep.subr.mxu0 0.0
        %232 = vmatpush2.msra.mxu0 0.0
        %233 = vmatprep.subr.mxu0 0.0
        %234 = vmatpush2.msra.mxu0 0.0
        %235 = vmatprep.subr.mxu0 0.0
        %236 = vmatpush2.msra.mxu0 0.0
        %237 = vmatprep.subr.mxu0 0.0
        %238 = vmatpush2.msra.mxu0 0.0
        %239 = vmatprep.subr.mxu0 0.0
        %240 = vmatpush2.msra.mxu0 0.0
        %241 = vmatprep.subr.mxu0 0.0
        %242 = vmatpush2.msra.mxu0 0.0
        %243 = vmatprep.subr.mxu0 0.0
        %244 = vmatpush2.msra.mxu0 0.0
        %245 = vmatprep.subr.mxu0 0.0
        %246 = vmatpush2.msra.mxu0 0.0
        %247 = vmatprep.subr.mxu0 0.0
        %248 = vmatpush2.msra.mxu0 0.0
        %249 = vmatprep.subr.mxu0 0.0
        %250 = vmatpush2.msra.mxu0 0.0
        %251 = vmatprep.subr.mxu0 0.0
        %252 = vmatpush2.msra.mxu0 0.0
        %253 = vmatprep.subr.mxu0 0.0
        %254 = vmatpush2.msra.mxu0 0.0
        %255 = vmatprep.subr.mxu0 0.0
        %256 = vmatpush2.msra.mxu0 0.0
        %257 = vmatprep.mubr.f32.mxu0 0.0
        %258 = vmatmul.mubr.f32.gmra.mxu0 %v185
        %v259 = vpop.f32.mrf.mxu0
        %v260 = vadd.f32 0.0, %v259
        %v261 = vpop.f32.mrf.mxu0
        %262 = vmatprep.mubr.f32.mxu0 0.0
        %263 = vmatmul.mubr.f32.gmra.mxu0 %v188
        %v264 = vpop.f32.mrf.mxu0
        %v265 = vadd.f32 0.0, %v264
        %v266 = vpop.f32.mrf.mxu0
        %267 = vmatprep.mubr.f32.mxu0 0.0
        %268 = vmatmul.mubr.f32.gmra.mxu0 %v191
        %v269 = vpop.f32.mrf.mxu0
        %v270 = vadd.f32 0.0, %v269
        %v271 = vpop.f32.mrf.mxu0
        %272 = vdwg.mxu0
        %vm273 = vcmask 785408
        %274 = vst.msk [vmem:[%s164] sm:$0xff] %vm273, %v260
        %275 = vst.msk [vmem:[%s164 + $0x8] sm:$0xff] %vm273, %v265
        %276 = vst.msk [vmem:[%s164 + $0x10] sm:$0xff] %vm273, %v270
        %s277 = sand.u32 %s90, 1
        %s278 = scalar_lea.sflag [#allocation3], %s277
        %s279 = sand.u32 %s90, 1
        %s280 = smul.addr %s279, 24
        %s281 = scalar_lea.vmem [#allocation2], %s280
        // Predicated region
        $region29: #{tpu_custom_call.1} parent=27 // pred_check
          %p282 = pneg %p100
        $region30: #{tpu_custom_call.1} parent=27 // pred_check_branch
          %284 = sbr.rel (%p282) target = $region32
        $region31: #{tpu_custom_call.1} parent=27 // pred_region
          %s285 = smul.u32 3, %s20
          %s287 = ssub.s32 384, 384
          %288 = vsyncadd %s278, %s287
          %s289 = sadd.s32 %s21, %s285
          %s290 = smul.addr %s289, 128
          %s291 = scalar_lea.hbm %s2, %s290
          %s292 = sshll.u32 %s281, 4
          %s293 = int_to_ptr.vmem [resolvable:$true] %s292
          %298 = dma.vmem_to_hbm [thread:$0]  %s293, 384, %s291, %s278, 128, 128, 8
        $region32: #{tpu_custom_call.1} parent=27 // pred_fallthru
          _
      $region28: #{tpu_custom_call.1} parent=5 // pred_fallthru
        _
      %p299 = scmp.le.s32.totalorder 2, %s11
      // Predicated region
      $region33: #{tpu_custom_call.1} parent=5 // pred_check
        %p300 = pneg %p299
      $region34: #{tpu_custom_call.1} parent=5 // pred_check_branch
        %302 = sbr.rel (%p300) target = $region36
      $region35: #{tpu_custom_call.1} parent=5 // pred_region
        %s303 = ssub.s32 %s11, 2
        // Predicated region
        $region37: #{tpu_custom_call.1} parent=35 // pred_check
          %p304 = pneg %p106
        $region38: #{tpu_custom_call.1} parent=35 // pred_check_branch
          %306 = sbr.rel (%p304) target = $region40
        $region39: #{tpu_custom_call.1} parent=35 // pred_region
          %s307 = sand.u32 %s91, 1
          %s308 = scalar_lea.sflag [#allocation3], %s307
          %s309 = sand.u32 %s91, 1
          %s310 = smul.addr %s309, 24
          %s311 = scalar_lea.vmem [#allocation2], %s310
          %312 = dma.done %s308, 384
        $region40: #{tpu_custom_call.1} parent=35 // pred_fallthru
          _
      $region36: #{tpu_custom_call.1} parent=5 // pred_fallthru
        _
    $region6: #{tpu_custom_call.1} parent=1 // loop_footer
      %s15 = sadd.s32 1, %s11
    $region7: #{tpu_custom_call.1} parent=1 // loop_footer_branch
      %10 = sbr.rel target = $region3
    $region8: #{tpu_custom_call.1} parent=1 // loop_exit
      _
    %313 = vsyncpa [#allocation3], 1
    %s314 = scalar_lea.sflag [#allocation3], 1
    %315 = vsyncpa %s314, 1

</llo_original>
